<compile_context>
chip_gen: v5e
topology: v5e:2x2
jax: 0.10.0
libtpu: 0.0.40
codegen_flags: <defaults>
</compile_context>

<pallas_src>
import functools
import math

import jax
import jax.numpy as jnp
from jax import lax
from jax.experimental import pallas as pl
from jax.experimental.pallas import tpu as pltpu


def _rank_one_conv3d_kernel(p_ref, w_ref, gb_ref, o_ref, *, bb, n):
    """One grid step: one fused MXU matmul over BB examples + per-example epilogue.

    p_ref:  (Kp, BB*N)    bf16 im2col patches of x*alpha (built in the wrapper)
    w_ref:  (Cout, Kp)    bf16 shared conv weight, K zero-padded to Kp
    gb_ref: (BB, Cout, 2) f32  [...,0]=gamma, [...,1]=conv_bias*gamma + member_bias
    o_ref:  (Cout, BB*N)  output (lane-dense last dim)
    """
    # Single MXU matmul for all BB examples, f32 accumulation.
    acc = jnp.dot(w_ref[...], p_ref[...], preferred_element_type=jnp.float32)

    gb = gb_ref[...]                               # tiny (BB, Cout, 2) block, load once
    # Per-example rank-one output scale + pre-fused bias.  N is a multiple of 128 here,
    # so each column slice is lane-aligned and every store is an unmasked full tile.
    for i in range(bb):                            # short static unroll
        g = gb[i, :, 0:1]                          # (Cout, 1)
        fb = gb[i, :, 1:2]                         # (Cout, 1)
        o_ref[:, i * n:(i + 1) * n] = (
            acc[:, i * n:(i + 1) * n] * g + fb).astype(o_ref.dtype)


def rank_one_bnn_conv3d(x, weight, conv_bias, alpha, gamma, bias, *, padding=1):
    """x: (B, Cin, D, H, W) channels-first (torch NCDHW).
    weight: (Cout, Cin, kD, kH, kW) (torch layout). alpha: (B, Cin),
    gamma/bias: (B, Cout). Returns (B, Cout, Do, Ho, Wo)."""
    B, Cin, D, H, W = x.shape
    Cout, _, kD, kH, kW = weight.shape
    Do = D + 2 * padding - kD + 1
    Ho = H + 2 * padding - kH + 1
    Wo = W + 2 * padding - kW + 1
    N = Do * Ho * Wo
    K = Cin * kD * kH * kW
    Kp = ((K + 127) // 128) * 128        # pad contraction dim -> aligned MXU feed

    # ---- module semantics: conv(x*alpha); alpha folded into the input here ----
    xs = x * alpha[:, :, None, None, None]
    xp = jnp.pad(xs, ((0, 0), (0, 0),
                      (padding, padding), (padding, padding),
                      (padding, padding))).astype(jnp.bfloat16)

    # ---- wrapper-side im2col -> lane-dense (B, K, N) bf16 patches ----
    # Row order (cin-major, (kd,kh,kw)-minor) matches weight.reshape(Cout, K) below.
    patches = jnp.stack(
        [xp[:, :, kd:kd + Do, kh:kh + Ho, kw:kw + Wo]
         for kd in range(kD) for kh in range(kH) for kw in range(kW)],
        axis=2).reshape(B, K, N)
    patches = jnp.pad(patches, ((0, 0), (0, Kp - K), (0, 0)))       # zero K rows

    # ---- per-step example count BB: keep grid >= 2 while maximizing matmul N ----
    # TODO(synk): on v5e/v6e a single step (BB=B) is slightly better; on v7x switch the
    # batch axis to pltpu.CORE_PARALLEL and re-check the (Kp, BB*N) block vs 64 MiB VMEM.
    BB = max((bb for bb in range(1, B + 1) if B % bb == 0 and B // bb >= 2),
             default=B)
    G = B // BB
    BBN = BB * N

    # Group BB examples into one lane-dense slab per grid step: (G, Kp, BB*N).
    p_g = patches.reshape(G, BB, Kp, N).transpose(0, 2, 1, 3).reshape(G, Kp, BBN)

    # Shared weight, K zero-padded, bf16 (half the DMA bytes of f32).
    w_r = jnp.pad(weight.reshape(Cout, K), ((0, 0), (0, Kp - K))).astype(jnp.bfloat16)

    # Pack gamma and the pre-fused bias into one small side input:
    # (conv + cb)*gamma + bias == conv*gamma + (cb*gamma + bias)
    fbias = conv_bias[None, :] * gamma + bias                        # (B, Cout)
    gb = jnp.stack([gamma, fbias], axis=-1).reshape(G, BB, Cout, 2).astype(jnp.float32)

    kernel = functools.partial(_rank_one_conv3d_kernel, bb=BB, n=N)

    cost = pl.CostEstimate(
        flops=2 * B * Cout * Kp * N,
        transcendentals=0,
        bytes_accessed=int(p_g.size * 2 + w_r.size * 2 + gb.size * 4
                           + B * Cout * N * jnp.dtype(x.dtype).itemsize))

    out_g = pl.pallas_call(
        kernel,
        out_shape=jax.ShapeDtypeStruct((G, Cout, BBN), x.dtype),
        grid=(G,),
        in_specs=[
            pl.BlockSpec((None, Kp, BBN), lambda g: (g, 0, 0)),
            pl.BlockSpec((Cout, Kp), lambda g: (0, 0)),
            pl.BlockSpec((None, BB, Cout, 2), lambda g: (g, 0, 0, 0)),
        ],
        out_specs=pl.BlockSpec((None, Cout, BBN), lambda g: (g, 0, 0)),
        compiler_params=pltpu.CompilerParams(
            dimension_semantics=("parallel",),
            vmem_limit_bytes=32 * 1024 * 1024),
        cost_estimate=cost,
    )(p_g, w_r, gb)

    # Ungroup + free reshape back to the 5-D conv output.
    out = out_g.reshape(G, Cout, BB, N).transpose(0, 2, 1, 3)
    return out.reshape(B, Cout, Do, Ho, Wo)


def reparameterize(key, mu, logvar):
    std = jnp.exp(0.5 * logvar)
    eps = jax.random.normal(key, std.shape, std.dtype)
    return eps * std + mu


def build_per_example(sample, num_members, batch, extra):
    # torch: cat([sample]*n, dim=1).view(-1, C)  →  example b uses member b // n
    n = batch // num_members
    rep = jnp.concatenate([sample] * n, axis=1).reshape(-1, sample.shape[1])
    if extra != 0:
        rep = jnp.concatenate([rep, rep[:extra]], axis=0)
    return rep


if __name__ == "__main__":
    # module config (kwargs of nn.Conv3d): kernel_size=3, stride=1, padding=1, bias=True
    M = 4              # num_members
    Cin, Cout = 4, 8
    kD = kH = kW = 3
    pad = 1
    B, D, H, W = 8, 8, 8, 8          # B divisible by M → extra == 0

    key = jax.random.PRNGKey(0)
    ks = jax.random.split(key, 12)

    # --- deterministic parameter init (mirrors reset_parameters, constant_init=False) ---
    alpha_mean = 1.0 + 0.5 * jax.random.normal(ks[0], (M, Cin), jnp.float32)
    alpha_logvar = 0.05 * jax.random.normal(ks[1], (M, Cin), jnp.float32)
    gamma_mean = 1.0 + 0.5 * jax.random.normal(ks[2], (M, Cout), jnp.float32)
    gamma_logvar = 0.05 * jax.random.normal(ks[3], (M, Cout), jnp.float32)
    # random_sign_init
    alpha_mean = alpha_mean * (2.0 * jax.random.randint(ks[4], (M, Cin), 0, 2) - 1)
    gamma_mean = gamma_mean * (2.0 * jax.random.randint(ks[5], (M, Cout), 0, 2) - 1)

    fan_in = Cin * kD * kH * kW
    bound = 1.0 / math.sqrt(fan_in)
    conv_weight = jax.random.uniform(ks[6], (Cout, Cin, kD, kH, kW), jnp.float32,
                                     -bound, bound)
    conv_bias = jax.random.uniform(ks[7], (Cout,), jnp.float32, -bound, bound)
    member_bias = jax.random.uniform(ks[8], (M, Cout), jnp.float32, -bound, bound)

    # --- forward-pass glue (sampling + per-example rank-one factor construction) ---
    alpha_sample = reparameterize(ks[9], alpha_mean, alpha_logvar)    # (M, Cin)
    gamma_sample = reparameterize(ks[10], gamma_mean, gamma_logvar)   # (M, Cout)
    # TODO(synk): kld_loss is a training-only side attribute (not returned); skipped.

    extra = B - (B // M) * M
    alpha = build_per_example(alpha_sample, M, B, extra)              # (B, Cin)
    gamma = build_per_example(gamma_sample, M, B, extra)              # (B, Cout)
    bias = build_per_example(member_bias, M, B, extra)                # (B, Cout)

    x = jax.random.normal(ks[11], (B, Cin, D, H, W), jnp.float32)

    out = rank_one_bnn_conv3d(x, conv_weight, conv_bias, alpha, gamma, bias,
                              padding=pad)
    out = jax.block_until_ready(out)
    assert out.shape == (B, Cout, D, H, W), out.shape

    # --- reference 1 (tight): identical bf16 quantization points (x*alpha and w) ---
    xs_q = (x * alpha[:, :, None, None, None]).astype(jnp.bfloat16).astype(jnp.float32)
    w_q = conv_weight.astype(jnp.bfloat16).astype(jnp.float32)
    ref = lax.conv_general_dilated(
        xs_q, w_q, window_strides=(1, 1, 1),
        padding=((pad, pad),) * 3,
        dimension_numbers=("NCDHW", "OIDHW", "NCDHW"),
        precision=lax.Precision.HIGHEST)
    fused_bias = conv_bias[None, :] * gamma + bias
    ref = ref * gamma[:, :, None, None, None] + fused_bias[:, :, None, None, None]
    assert jnp.allclose(out, ref, atol=2e-3, rtol=2e-3), \
        float(jnp.max(jnp.abs(out - ref)))

    # --- reference 2 (loose sanity check against the exact f32 module semantics) ---
    ref32 = lax.conv_general_dilated(
        x * alpha[:, :, None, None, None], conv_weight,
        window_strides=(1, 1, 1),
        padding=((pad, pad),) * 3,
        dimension_numbers=("NCDHW", "OIDHW", "NCDHW"),
        precision=lax.Precision.HIGHEST)
    ref32 = (ref32 + conv_bias[None, :, None, None, None]) \
            * gamma[:, :, None, None, None] + bias[:, :, None, None, None]
    assert jnp.allclose(out, ref32, atol=1e-1, rtol=1e-1), \
        float(jnp.max(jnp.abs(out - ref32)))

    print("KERNEL_OK")
</pallas_src>

<mosaic_0001>
module attributes {stable_mosaic.version = 11 : i64} {
  func.func @_rank_one_conv3d_kernel(%arg0: i32, %arg1: memref<1x128x2048xbf16, #tpu.memory_space<vmem>>, %arg2: memref<8x128xbf16, #tpu.memory_space<vmem>>, %arg3: memref<1x4x8x2xf32, #tpu.memory_space<vmem>>, %arg4: memref<1x8x2048xf32, #tpu.memory_space<vmem>>) attributes {dimension_semantics = [#tpu.dimension_semantics<parallel>], iteration_bounds = array<i64: 2>, scalar_prefetch = 0 : i64, scratch_operands = 0 : i64, tpu.core_type = #tpu.core_type<tc>, window_params = [{transform_indices = @transform_0, window_bounds = array<i64: 1, 128, 2048>}, {pipeline_mode = #tpu.pipeline_mode<synchronous>, transform_indices = @transform_1, window_bounds = array<i64: 8, 128>}, {transform_indices = @transform_2, window_bounds = array<i64: 1, 4, 8, 2>}, {transform_indices = @transform_3, window_bounds = array<i64: 1, 8, 2048>}]} {
    %c0 = arith.constant 0 : index
    %c0_0 = arith.constant 0 : index
    %0 = vector.load %arg2[%c0, %c0_0] : memref<8x128xbf16, #tpu.memory_space<vmem>>, vector<8x128xbf16>
    %c0_1 = arith.constant 0 : index
    %c0_2 = arith.constant 0 : index
    %c0_3 = arith.constant 0 : index
    %1 = vector.load %arg1[%c0_1, %c0_2, %c0_3] : memref<1x128x2048xbf16, #tpu.memory_space<vmem>>, vector<1x128x2048xbf16>
    %2 = vector.shape_cast %1 : vector<1x128x2048xbf16> to vector<128x2048xbf16>
    %cst = arith.constant dense<0.000000e+00> : vector<8x2048xf32>
    %3 = tpu.matmul %0, %2, %cst {dimension_numbers = #tpu.dot_dimension_numbers<[1], [0], [0], [1], [0, 0, 1, 1], [], []>} : vector<8x128xbf16>, vector<128x2048xbf16>, vector<8x2048xf32> -> vector<8x2048xf32>
    %c0_4 = arith.constant 0 : index
    %c0_5 = arith.constant 0 : index
    %c0_6 = arith.constant 0 : index
    %c0_7 = arith.constant 0 : index
    %4 = vector.load %arg3[%c0_4, %c0_5, %c0_6, %c0_7] : memref<1x4x8x2xf32, #tpu.memory_space<vmem>>, vector<1x4x8x2xf32>
    %5 = vector.shape_cast %4 : vector<1x4x8x2xf32> to vector<4x8x2xf32>
    %6 = vector.extract_strided_slice %5 {offsets = [0, 0, 0], sizes = [1, 8, 1], strides = [1, 1, 1]} : vector<4x8x2xf32> to vector<1x8x1xf32>
    %7 = vector.shape_cast %6 : vector<1x8x1xf32> to vector<8x1xf32>
    %8 = vector.extract_strided_slice %5 {offsets = [0, 0, 1], sizes = [1, 8, 1], strides = [1, 1, 1]} : vector<4x8x2xf32> to vector<1x8x1xf32>
    %9 = vector.shape_cast %8 : vector<1x8x1xf32> to vector<8x1xf32>
    %10 = vector.extract_strided_slice %3 {offsets = [0, 0], sizes = [8, 512], strides = [1, 1]} : vector<8x2048xf32> to vector<8x512xf32>
    %11 = vector.broadcast %7 : vector<8x1xf32> to vector<8x512xf32>
    %12 = arith.mulf %10, %11 : vector<8x512xf32>
    %13 = vector.broadcast %9 : vector<8x1xf32> to vector<8x512xf32>
    %14 = arith.addf %12, %13 : vector<8x512xf32>
    %c0_8 = arith.constant 0 : index
    %c0_9 = arith.constant 0 : index
    %c0_10 = arith.constant 0 : index
    %15 = vector.load %arg4[%c0_8, %c0_9, %c0_10] : memref<1x8x2048xf32, #tpu.memory_space<vmem>>, vector<1x8x512xf32>
    %16 = vector.shape_cast %15 : vector<1x8x512xf32> to vector<8x512xf32>
    %17 = vector.shape_cast %14 : vector<8x512xf32> to vector<1x8x512xf32>
    tpu.vector_store %arg4[%c0_8, %c0_9, %c0_10], %17 {strides = array<i32>} : memref<1x8x2048xf32, #tpu.memory_space<vmem>>, vector<1x8x512xf32>,
    %18 = vector.extract_strided_slice %5 {offsets = [1, 0, 0], sizes = [1, 8, 1], strides = [1, 1, 1]} : vector<4x8x2xf32> to vector<1x8x1xf32>
    %19 = vector.shape_cast %18 : vector<1x8x1xf32> to vector<8x1xf32>
    %20 = vector.extract_strided_slice %5 {offsets = [1, 0, 1], sizes = [1, 8, 1], strides = [1, 1, 1]} : vector<4x8x2xf32> to vector<1x8x1xf32>
    %21 = vector.shape_cast %20 : vector<1x8x1xf32> to vector<8x1xf32>
    %22 = vector.extract_strided_slice %3 {offsets = [0, 512], sizes = [8, 512], strides = [1, 1]} : vector<8x2048xf32> to vector<8x512xf32>
    %23 = vector.broadcast %19 : vector<8x1xf32> to vector<8x512xf32>
    %24 = arith.mulf %22, %23 : vector<8x512xf32>
    %25 = vector.broadcast %21 : vector<8x1xf32> to vector<8x512xf32>
    %26 = arith.addf %24, %25 : vector<8x512xf32>
    %c0_11 = arith.constant 0 : index
    %c0_12 = arith.constant 0 : index
    %c512 = arith.constant 512 : index
    %27 = vector.load %arg4[%c0_11, %c0_12, %c512] : memref<1x8x2048xf32, #tpu.memory_space<vmem>>, vector<1x8x512xf32>
    %28 = vector.shape_cast %27 : vector<1x8x512xf32> to vector<8x512xf32>
    %29 = vector.shape_cast %26 : vector<8x512xf32> to vector<1x8x512xf32>
    tpu.vector_store %arg4[%c0_11, %c0_12, %c512], %29 {strides = array<i32>} : memref<1x8x2048xf32, #tpu.memory_space<vmem>>, vector<1x8x512xf32>,
    %30 = vector.extract_strided_slice %5 {offsets = [2, 0, 0], sizes = [1, 8, 1], strides = [1, 1, 1]} : vector<4x8x2xf32> to vector<1x8x1xf32>
    %31 = vector.shape_cast %30 : vector<1x8x1xf32> to vector<8x1xf32>
    %32 = vector.extract_strided_slice %5 {offsets = [2, 0, 1], sizes = [1, 8, 1], strides = [1, 1, 1]} : vector<4x8x2xf32> to vector<1x8x1xf32>
    %33 = vector.shape_cast %32 : vector<1x8x1xf32> to vector<8x1xf32>
    %34 = vector.extract_strided_slice %3 {offsets = [0, 1024], sizes = [8, 512], strides = [1, 1]} : vector<8x2048xf32> to vector<8x512xf32>
    %35 = vector.broadcast %31 : vector<8x1xf32> to vector<8x512xf32>
    %36 = arith.mulf %34, %35 : vector<8x512xf32>
    %37 = vector.broadcast %33 : vector<8x1xf32> to vector<8x512xf32>
    %38 = arith.addf %36, %37 : vector<8x512xf32>
    %c0_13 = arith.constant 0 : index
    %c0_14 = arith.constant 0 : index
    %c1024 = arith.constant 1024 : index
    %39 = vector.load %arg4[%c0_13, %c0_14, %c1024] : memref<1x8x2048xf32, #tpu.memory_space<vmem>>, vector<1x8x512xf32>
    %40 = vector.shape_cast %39 : vector<1x8x512xf32> to vector<8x512xf32>
    %41 = vector.shape_cast %38 : vector<8x512xf32> to vector<1x8x512xf32>
    tpu.vector_store %arg4[%c0_13, %c0_14, %c1024], %41 {strides = array<i32>} : memref<1x8x2048xf32, #tpu.memory_space<vmem>>, vector<1x8x512xf32>,
    %42 = vector.extract_strided_slice %5 {offsets = [3, 0, 0], sizes = [1, 8, 1], strides = [1, 1, 1]} : vector<4x8x2xf32> to vector<1x8x1xf32>
    %43 = vector.shape_cast %42 : vector<1x8x1xf32> to vector<8x1xf32>
    %44 = vector.extract_strided_slice %5 {offsets = [3, 0, 1], sizes = [1, 8, 1], strides = [1, 1, 1]} : vector<4x8x2xf32> to vector<1x8x1xf32>
    %45 = vector.shape_cast %44 : vector<1x8x1xf32> to vector<8x1xf32>
    %46 = vector.extract_strided_slice %3 {offsets = [0, 1536], sizes = [8, 512], strides = [1, 1]} : vector<8x2048xf32> to vector<8x512xf32>
    %47 = vector.broadcast %43 : vector<8x1xf32> to vector<8x512xf32>
    %48 = arith.mulf %46, %47 : vector<8x512xf32>
    %49 = vector.broadcast %45 : vector<8x1xf32> to vector<8x512xf32>
    %50 = arith.addf %48, %49 : vector<8x512xf32>
    %c0_15 = arith.constant 0 : index
    %c0_16 = arith.constant 0 : index
    %c1536 = arith.constant 1536 : index
    %51 = vector.load %arg4[%c0_15, %c0_16, %c1536] : memref<1x8x2048xf32, #tpu.memory_space<vmem>>, vector<1x8x512xf32>
    %52 = vector.shape_cast %51 : vector<1x8x512xf32> to vector<8x512xf32>
    %53 = vector.shape_cast %50 : vector<8x512xf32> to vector<1x8x512xf32>
    tpu.vector_store %arg4[%c0_15, %c0_16, %c1536], %53 {strides = array<i32>} : memref<1x8x2048xf32, #tpu.memory_space<vmem>>, vector<1x8x512xf32>,
    return
  }
  func.func @transform_0(%arg0: i32) -> (i32, i32, i32) {
    %c0_i32 = arith.constant 0 : i32
    %c0_i32_0 = arith.constant 0 : i32
    %c0_i32_1 = arith.constant 0 : i32
    return %arg0, %c0_i32, %c0_i32_0 : i32, i32, i32
  }
  func.func @transform_1(%arg0: i32) -> (i32, i32) {
    %c0_i32 = arith.constant 0 : i32
    %c0_i32_0 = arith.constant 0 : i32
    %c0_i32_1 = arith.constant 0 : i32
    return %c0_i32, %c0_i32_0 : i32, i32
  }
  func.func @transform_2(%arg0: i32) -> (i32, i32, i32, i32) {
    %c0_i32 = arith.constant 0 : i32
    %c0_i32_0 = arith.constant 0 : i32
    %c0_i32_1 = arith.constant 0 : i32
    %c0_i32_2 = arith.constant 0 : i32
    return %arg0, %c0_i32, %c0_i32_0, %c0_i32_1 : i32, i32, i32, i32
  }
  func.func @transform_3(%arg0: i32) -> (i32, i32, i32) {
    %c0_i32 = arith.constant 0 : i32
    %c0_i32_0 = arith.constant 0 : i32
    %c0_i32_1 = arith.constant 0 : i32
    return %arg0, %c0_i32, %c0_i32_0 : i32, i32, i32
  }
}

</mosaic_0001>

<llo_original>
// kernel: tpu_custom_call.1
$region0: #{tpu_custom_call.1}
  #allocation0 [shape = 'u32[]', space=smem, size = 0x4, offset = 0x4, fixed_abs, tag = 'smem constant byte address 0x4 - core index']
  #allocation1 [shape = 'u32[72,128]{1,0:T(1,128)}', space=vmem, size = 0x9000, scoped, tag = 'internal scratch']
  %s0 = inlined_call_operand.hbm [shape: bf16[2,128,2048], index: 0, kind: input, shape index: {}]
  %s1 = inlined_call_operand.vmem [shape: bf16[8,128], index: 1, kind: input, shape index: {}]
  %s2 = inlined_call_operand.vmem [shape: f32[2,4,8,2], index: 2, kind: input, shape index: {}]
  %s3 = inlined_call_operand.hbm [shape: f32[2,8,2048], index: 3, kind: output, shape index: {}]
  %s4 = sld [smem:[#allocation0]]
  $region49: #{tpu_custom_call.1} parent=0
    _
  %s6 = ssub.s32 1, %s4
  %s7 = scalar_select 0, %s6, %s4
  $region1: #{tpu_custom_call.1} parent=0
    #allocation2 [shape = 'u8[1048576]{0}', space=vmem, size = 0x100000, scoped, tag = 'input window, operand 0']
    #allocation3 [shape = 's32[2]{0}', space=sflag, size = 0x8, scoped, tag = 'scoped memory for tpu_custom_call.1']
    #allocation4 [shape = 's32[2]{0}', space=sflag, size = 0x8, scoped, tag = 'scoped memory for tpu_custom_call.1']
    #allocation5 [shape = 'u8[131072]{0}', space=vmem, size = 0x20000, scoped, tag = 'output window, operand 0']
    %8 = vsyncpa [#allocation3], 0
    %s9 = scalar_lea.sflag [#allocation3], 1
    %10 = vsyncpa %s9, 0
    %11 = vsyncpa [#allocation4], 0
    %s12 = scalar_lea.sflag [#allocation4], 1
    %13 = vsyncpa %s12, 0
    loop: start=0, step=1, limit=4
    $region2: #{tpu_custom_call.1} parent=1 // loop_pre_header
      _
    $region3: #{tpu_custom_call.1} parent=1 // loop_header
      %s15 = sphi 0, %s19
      %p16 = scmp.ge.s32.totalorder %s15, 4
      %s25 = sphi 0, %s27
      %s28 = sphi 0, %s25
      %s29 = sphi 0, %s28
      %s45 = sphi 0, %s29
      %s49 = sphi 0, %s49
      %s51 = sphi 0, %s49
      %s52 = sphi 0, %s51
      %s66 = sphi 0, %s52
      %s72 = sphi 0, %s74
      %s75 = sphi 0, %s72
      %s76 = sphi 0, %s75
      %s92 = sphi 0, %s76
      %s98 = sphi 0, %s100
      %s101 = sphi 0, %s98
      %s102 = sphi 0, %s101
      %s118 = sphi 0, %s102
    $region4: #{tpu_custom_call.1} parent=1 // loop_header_branch
      %18 = sbr.rel (%p16) target = $region8
    $region5: #{tpu_custom_call.1} parent=1 // loop_body
      %s20 = ssub.s32 %s15, 1
      %s21 = ssub.s32 %s15, 2
      %s22 = sadd.s32 %s15, 1
      %s23 = ssub.s32 %s15, %s22
      %p24 = scmp.eq.s32.totalorder %s23, 0
      %s26 = sadd.s32 %s25, 1
      %s27 = scalar_select %p24, %s25, %s26
      %p30 = pneg %p24
      %p31 = scmp.eq.s32.totalorder %s15, 1
      %p32 = por %p30, %p31
      %p33 = scmp.ne.s32.totalorder %s25, %s28
      %p34 = scmp.eq.s32.totalorder %s15, 0
      %p35 = por %p33, %p34
      %p36 = scmp.ne.s32.totalorder %s25, %s28
      %p37 = scmp.eq.s32.totalorder %s20, 1
      %p38 = por %p36, %p37
      %p39 = scmp.ne.s32.totalorder %s28, %s29
      %p40 = scmp.eq.s32.totalorder %s20, 0
      %p41 = por %p39, %p40
      %p42 = scmp.ne.s32.totalorder %s28, %s29
      %p43 = scmp.eq.s32.totalorder %s21, 1
      %p44 = por %p42, %p43
      %p46 = scmp.ne.s32.totalorder %s29, %s45
      %p47 = scmp.eq.s32.totalorder %s21, 0
      %p48 = por %p46, %p47
      %s50 = sadd.s32 %s49, 1
      %p53 = scmp.eq.s32.totalorder %s15, 1
      %p54 = scmp.ne.s32.totalorder %s49, %s51
      %p55 = scmp.eq.s32.totalorder %s15, 0
      %p56 = por %p54, %p55
      %p57 = scmp.ne.s32.totalorder %s49, %s51
      %p58 = scmp.eq.s32.totalorder %s20, 1
      %p59 = por %p57, %p58
      %p60 = scmp.ne.s32.totalorder %s51, %s52
      %p61 = scmp.eq.s32.totalorder %s20, 0
      %p62 = por %p60, %p61
      %p63 = scmp.ne.s32.totalorder %s51, %s52
      %p64 = scmp.eq.s32.totalorder %s21, 1
      %p65 = por %p63, %p64
      %p67 = scmp.ne.s32.totalorder %s52, %s66
      %p68 = scmp.eq.s32.totalorder %s21, 0
      %p69 = por %p67, %p68
      %s70 = ssub.s32 %s15, %s22
      %p71 = scmp.eq.s32.totalorder %s70, 0
      %s73 = sadd.s32 %s72, 1
      %s74 = scalar_select %p71, %s72, %s73
      %p77 = pneg %p71
      %p78 = scmp.eq.s32.totalorder %s15, 1
      %p79 = por %p77, %p78
      %p80 = scmp.ne.s32.totalorder %s72, %s75
      %p81 = scmp.eq.s32.totalorder %s15, 0
      %p82 = por %p80, %p81
      %p83 = scmp.ne.s32.totalorder %s72, %s75
      %p84 = scmp.eq.s32.totalorder %s20, 1
      %p85 = por %p83, %p84
      %p86 = scmp.ne.s32.totalorder %s75, %s76
      %p87 = scmp.eq.s32.totalorder %s20, 0
      %p88 = por %p86, %p87
      %p89 = scmp.ne.s32.totalorder %s75, %s76
      %p90 = scmp.eq.s32.totalorder %s21, 1
      %p91 = por %p89, %p90
      %p93 = scmp.ne.s32.totalorder %s76, %s92
      %p94 = scmp.eq.s32.totalorder %s21, 0
      %p95 = por %p93, %p94
      %s96 = ssub.s32 %s15, %s22
      %p97 = scmp.eq.s32.totalorder %s96, 0
      %s99 = sadd.s32 %s98, 1
      %s100 = scalar_select %p97, %s98, %s99
      %p103 = pneg %p97
      %p104 = scmp.eq.s32.totalorder %s15, 1
      %p105 = por %p103, %p104
      %p106 = scmp.ne.s32.totalorder %s98, %s101
      %p107 = scmp.eq.s32.totalorder %s15, 0
      %p108 = por %p106, %p107
      %p109 = scmp.ne.s32.totalorder %s98, %s101
      %p110 = scmp.eq.s32.totalorder %s20, 1
      %p111 = por %p109, %p110
      %p112 = scmp.ne.s32.totalorder %s101, %s102
      %p113 = scmp.eq.s32.totalorder %s20, 0
      %p114 = por %p112, %p113
      %p115 = scmp.ne.s32.totalorder %s101, %s102
      %p116 = scmp.eq.s32.totalorder %s21, 1
      %p117 = por %p115, %p116
      %p119 = scmp.ne.s32.totalorder %s102, %s118
      %p120 = scmp.eq.s32.totalorder %s21, 0
      %p121 = por %p119, %p120
      %p122 = scmp.le.s32.totalorder 1, %s15
      %p123 = scmp.lt.s32.totalorder %s15, 3
      %p124 = pnand %p122, %p123
      %p125 = pneg %p124
      // Predicated region
      $region9: #{tpu_custom_call.1} parent=5 // pred_check
        _
      $region10: #{tpu_custom_call.1} parent=5 // pred_check_branch
        %127 = sbr.rel (%p124) target = $region12
      $region11: #{tpu_custom_call.1} parent=5 // pred_region
        %s128 = ssub.s32 %s15, 1
        // Predicated region
        $region13: #{tpu_custom_call.1} parent=11 // pred_check
          %p129 = pneg %p62
        $region14: #{tpu_custom_call.1} parent=11 // pred_check_branch
          %131 = sbr.rel (%p129) target = $region16
        $region15: #{tpu_custom_call.1} parent=11 // pred_region
          _
        $region16: #{tpu_custom_call.1} parent=11 // pred_fallthru
          _
      $region12: #{tpu_custom_call.1} parent=5 // pred_fallthru
        _
      %p132 = scmp.lt.s32.totalorder %s15, 2
      // Predicated region
      $region17: #{tpu_custom_call.1} parent=5 // pred_check
        %p133 = pneg %p132
      $region18: #{tpu_custom_call.1} parent=5 // pred_check_branch
        %135 = sbr.rel (%p133) target = $region20
      $region19: #{tpu_custom_call.1} parent=5 // pred_region
        // Predicated region
        $region21: #{tpu_custom_call.1} parent=19 // pred_check
          %p136 = pneg %p35
        $region22: #{tpu_custom_call.1} parent=19 // pred_check_branch
          %138 = sbr.rel (%p136) target = $region24
        $region23: #{tpu_custom_call.1} parent=19 // pred_region
          %s139 = sand.u32 %s25, 1
          %s140 = scalar_lea.sflag [#allocation3], %s139
          %s141 = sand.u32 %s25, 1
          %s142 = smul.addr %s141, 1024
          %s143 = scalar_lea.vmem [#allocation2], %s142
          %145 = vsyncadd %s140, 0
          %s146 = smul.addr %s15, 256
          %s147 = smul.addr %s146, 4
          %s148 = scalar_lea.hbm %s0, %s147
          %s149 = sshll.u32 %s148, 4
          %s150 = int_to_ptr.hbm [resolvable:$true] %s149
          %s151 = sshll.u32 %s143, 4
          %s152 = int_to_ptr.vmem [resolvable:$true] %s151
          %157 = dma.hbm_to_vmem [thread:$0]  %s150, 16384, %s152, %s140, 1024, 1024, 64
        $region24: #{tpu_custom_call.1} parent=19 // pred_fallthru
          _
        // Predicated region
        $region25: #{tpu_custom_call.1} parent=19 // pred_check
          %p158 = pneg %p82
        $region26: #{tpu_custom_call.1} parent=19 // pred_check_branch
          %160 = sbr.rel (%p158) target = $region28
        $region27: #{tpu_custom_call.1} parent=19 // pred_region
          %p161 = scmp.lt.s32.totalorder %s15, 1
          %s162 = scalar_select %p161, %s15, 1
          %s163 = smul.addr %s162, 4
          %s164 = smul.addr %s163, 8
          %s165 = scalar_lea.vmem %s2, %s164
        $region28: #{tpu_custom_call.1} parent=19 // pred_fallthru
          _
      $region20: #{tpu_custom_call.1} parent=5 // pred_fallthru
        _
      %p166 = scmp.le.s32.totalorder 1, %s15
      %p167 = scmp.lt.s32.totalorder %s15, 3
      %p168 = pnand %p166, %p167
      %p169 = pneg %p168
      // Predicated region
      $region29: #{tpu_custom_call.1} parent=5 // pred_check
        _
      $region30: #{tpu_custom_call.1} parent=5 // pred_check_branch
        %171 = sbr.rel (%p168) target = $region32
      $region31: #{tpu_custom_call.1} parent=5 // pred_region
        %s172 = ssub.s32 %s15, 1
        %s173 = sand.u32 %s28, 1
        %s174 = scalar_lea.sflag [#allocation3], %s173
        %s175 = sand.u32 %s28, 1
        %s176 = smul.addr %s175, 1024
        %s177 = scalar_lea.vmem [#allocation2], %s176
        // Predicated region
        $region33: #{tpu_custom_call.1} parent=31 // pred_check
          %p178 = pneg %p41
        $region34: #{tpu_custom_call.1} parent=31 // pred_check_branch
          %180 = sbr.rel (%p178) target = $region36
        $region35: #{tpu_custom_call.1} parent=31 // pred_region
          %182 = dma.done %s174, 16384
        $region36: #{tpu_custom_call.1} parent=31 // pred_fallthru
          _
        %s183 = sand.u32 %s28, 1
        %s184 = scalar_lea.sflag [#allocation3], %s183
        %s185 = sand.u32 %s28, 1
        %s186 = smul.addr %s185, 1024
        %s187 = scalar_lea.vmem [#allocation2], %s186
        %p188 = pneg %p41
        %p189 = pneg %p38
        %p190 = pneg %p62
        %p191 = pneg %p59
        %p192 = scmp.lt.s32.totalorder %s20, 1
        %s193 = scalar_select %p192, %s20, 1
        %s194 = smul.addr %s193, 4
        %s195 = smul.addr %s194, 8
        %s196 = scalar_lea.vmem %s2, %s195
        %p197 = pneg %p88
        %p198 = pneg %p85
        %p199 = pneg %p114
        %p200 = pneg %p111
        %s201 = sand.u32 %s101, 1
        %s202 = scalar_lea.sflag [#allocation4], %s201
        %s203 = sand.u32 %s101, 1
        %s204 = smul.addr %s203, 128
        %s205 = scalar_lea.vmem [#allocation5], %s204
        %p206 = scmp.lt.s32.totalorder %s20, 1
        %s207 = scalar_select %p206, %s20, 1
        %s208 = smul.addr %s207, 4
        %s209 = smul.addr %s208, 8
        %s210 = scalar_lea.vmem %s2, %s209
        %v211 = vld [vmem:[%s1] sm:$0xf]
        %v212 = vld [vmem:[%s177] sm:$0xff]
        %v213 = vld [vmem:[%s177 + $0x8] sm:$0xff]
        %v214 = vld [vmem:[%s177 + $0x10] sm:$0xff]
        %v215 = vld [vmem:[%s177 + $0x18] sm:$0xff]
        %v216 = vld [vmem:[%s177 + $0x20] sm:$0xff]
        %v217 = vld [vmem:[%s177 + $0x28] sm:$0xff]
        %v218 = vld [vmem:[%s177 + $0x30] sm:$0xff]
        %v219 = vld [vmem:[%s177 + $0x38] sm:$0xff]
        %v220 = vld [vmem:[%s177 + $0x40] sm:$0xff]
        %v221 = vld [vmem:[%s177 + $0x48] sm:$0xff]
        %v222 = vld [vmem:[%s177 + $0x50] sm:$0xff]
        %v223 = vld [vmem:[%s177 + $0x58] sm:$0xff]
        %v224 = vld [vmem:[%s177 + $0x60] sm:$0xff]
        %v225 = vld [vmem:[%s177 + $0x68] sm:$0xff]
        %v226 = vld [vmem:[%s177 + $0x70] sm:$0xff]
        %v227 = vld [vmem:[%s177 + $0x78] sm:$0xff]
        %v228 = vld [vmem:[%s177 + $0x80] sm:$0xff]
        %v229 = vld [vmem:[%s177 + $0x88] sm:$0xff]
        %v230 = vld [vmem:[%s177 + $0x90] sm:$0xff]
        %v231 = vld [vmem:[%s177 + $0x98] sm:$0xff]
        %v232 = vld [vmem:[%s177 + $0xa0] sm:$0xff]
        %v233 = vld [vmem:[%s177 + $0xa8] sm:$0xff]
        %v234 = vld [vmem:[%s177 + $0xb0] sm:$0xff]
        %v235 = vld [vmem:[%s177 + $0xb8] sm:$0xff]
        %v236 = vld [vmem:[%s177 + $0xc0] sm:$0xff]
        %v237 = vld [vmem:[%s177 + $0xc8] sm:$0xff]
        %v238 = vld [vmem:[%s177 + $0xd0] sm:$0xff]
        %v239 = vld [vmem:[%s177 + $0xd8] sm:$0xff]
        %v240 = vld [vmem:[%s177 + $0xe0] sm:$0xff]
        %v241 = vld [vmem:[%s177 + $0xe8] sm:$0xff]
        %v242 = vld [vmem:[%s177 + $0xf0] sm:$0xff]
        %v243 = vld [vmem:[%s177 + $0xf8] sm:$0xff]
        %v244 = vld [vmem:[%s177 + $0x100] sm:$0xff]
        %v245 = vld [vmem:[%s177 + $0x108] sm:$0xff]
        %v246 = vld [vmem:[%s177 + $0x110] sm:$0xff]
        %v247 = vld [vmem:[%s177 + $0x118] sm:$0xff]
        %v248 = vld [vmem:[%s177 + $0x120] sm:$0xff]
        %v249 = vld [vmem:[%s177 + $0x128] sm:$0xff]
        %v250 = vld [vmem:[%s177 + $0x130] sm:$0xff]
        %v251 = vld [vmem:[%s177 + $0x138] sm:$0xff]
        %v252 = vld [vmem:[%s177 + $0x140] sm:$0xff]
        %v253 = vld [vmem:[%s177 + $0x148] sm:$0xff]
        %v254 = vld [vmem:[%s177 + $0x150] sm:$0xff]
        %v255 = vld [vmem:[%s177 + $0x158] sm:$0xff]
        %v256 = vld [vmem:[%s177 + $0x160] sm:$0xff]
        %v257 = vld [vmem:[%s177 + $0x168] sm:$0xff]
        %v258 = vld [vmem:[%s177 + $0x170] sm:$0xff]
        %v259 = vld [vmem:[%s177 + $0x178] sm:$0xff]
        %v260 = vld [vmem:[%s177 + $0x180] sm:$0xff]
        %v261 = vld [vmem:[%s177 + $0x188] sm:$0xff]
        %v262 = vld [vmem:[%s177 + $0x190] sm:$0xff]
        %v263 = vld [vmem:[%s177 + $0x198] sm:$0xff]
        %v264 = vld [vmem:[%s177 + $0x1a0] sm:$0xff]
        %v265 = vld [vmem:[%s177 + $0x1a8] sm:$0xff]
        %v266 = vld [vmem:[%s177 + $0x1b0] sm:$0xff]
        %v267 = vld [vmem:[%s177 + $0x1b8] sm:$0xff]
        %v268 = vld [vmem:[%s177 + $0x1c0] sm:$0xff]
        %v269 = vld [vmem:[%s177 + $0x1c8] sm:$0xff]
        %v270 = vld [vmem:[%s177 + $0x1d0] sm:$0xff]
        %v271 = vld [vmem:[%s177 + $0x1d8] sm:$0xff]
        %v272 = vld [vmem:[%s177 + $0x1e0] sm:$0xff]
        %v273 = vld [vmem:[%s177 + $0x1e8] sm:$0xff]
        %v274 = vld [vmem:[%s177 + $0x1f0] sm:$0xff]
        %v275 = vld [vmem:[%s177 + $0x1f8] sm:$0xff]
        %v276 = vld [vmem:[%s177 + $0x200] sm:$0xff]
        %v277 = vld [vmem:[%s177 + $0x208] sm:$0xff]
        %v278 = vld [vmem:[%s177 + $0x210] sm:$0xff]
        %v279 = vld [vmem:[%s177 + $0x218] sm:$0xff]
        %v280 = vld [vmem:[%s177 + $0x220] sm:$0xff]
        %v281 = vld [vmem:[%s177 + $0x228] sm:$0xff]
        %v282 = vld [vmem:[%s177 + $0x230] sm:$0xff]
        %v283 = vld [vmem:[%s177 + $0x238] sm:$0xff]
        %v284 = vld [vmem:[%s177 + $0x240] sm:$0xff]
        %v285 = vld [vmem:[%s177 + $0x248] sm:$0xff]
        %v286 = vld [vmem:[%s177 + $0x250] sm:$0xff]
        %v287 = vld [vmem:[%s177 + $0x258] sm:$0xff]
        %v288 = vld [vmem:[%s177 + $0x260] sm:$0xff]
        %v289 = vld [vmem:[%s177 + $0x268] sm:$0xff]
        %v290 = vld [vmem:[%s177 + $0x270] sm:$0xff]
        %v291 = vld [vmem:[%s177 + $0x278] sm:$0xff]
        %v292 = vld [vmem:[%s177 + $0x280] sm:$0xff]
        %v293 = vld [vmem:[%s177 + $0x288] sm:$0xff]
        %v294 = vld [vmem:[%s177 + $0x290] sm:$0xff]
        %v295 = vld [vmem:[%s177 + $0x298] sm:$0xff]
        %v296 = vld [vmem:[%s177 + $0x2a0] sm:$0xff]
        %v297 = vld [vmem:[%s177 + $0x2a8] sm:$0xff]
        %v298 = vld [vmem:[%s177 + $0x2b0] sm:$0xff]
        %v299 = vld [vmem:[%s177 + $0x2b8] sm:$0xff]
        %v300 = vld [vmem:[%s177 + $0x2c0] sm:$0xff]
        %v301 = vld [vmem:[%s177 + $0x2c8] sm:$0xff]
        %v302 = vld [vmem:[%s177 + $0x2d0] sm:$0xff]
        %v303 = vld [vmem:[%s177 + $0x2d8] sm:$0xff]
        %v304 = vld [vmem:[%s177 + $0x2e0] sm:$0xff]
        %v305 = vld [vmem:[%s177 + $0x2e8] sm:$0xff]
        %v306 = vld [vmem:[%s177 + $0x2f0] sm:$0xff]
        %v307 = vld [vmem:[%s177 + $0x2f8] sm:$0xff]
        %v308 = vld [vmem:[%s177 + $0x300] sm:$0xff]
        %v309 = vld [vmem:[%s177 + $0x308] sm:$0xff]
        %v310 = vld [vmem:[%s177 + $0x310] sm:$0xff]
        %v311 = vld [vmem:[%s177 + $0x318] sm:$0xff]
        %v312 = vld [vmem:[%s177 + $0x320] sm:$0xff]
        %v313 = vld [vmem:[%s177 + $0x328] sm:$0xff]
        %v314 = vld [vmem:[%s177 + $0x330] sm:$0xff]
        %v315 = vld [vmem:[%s177 + $0x338] sm:$0xff]
        %v316 = vld [vmem:[%s177 + $0x340] sm:$0xff]
        %v317 = vld [vmem:[%s177 + $0x348] sm:$0xff]
        %v318 = vld [vmem:[%s177 + $0x350] sm:$0xff]
        %v319 = vld [vmem:[%s177 + $0x358] sm:$0xff]
        %v320 = vld [vmem:[%s177 + $0x360] sm:$0xff]
        %v321 = vld [vmem:[%s177 + $0x368] sm:$0xff]
        %v322 = vld [vmem:[%s177 + $0x370] sm:$0xff]
        %v323 = vld [vmem:[%s177 + $0x378] sm:$0xff]
        %v324 = vld [vmem:[%s177 + $0x380] sm:$0xff]
        %v325 = vld [vmem:[%s177 + $0x388] sm:$0xff]
        %v326 = vld [vmem:[%s177 + $0x390] sm:$0xff]
        %v327 = vld [vmem:[%s177 + $0x398] sm:$0xff]
        %v328 = vld [vmem:[%s177 + $0x3a0] sm:$0xff]
        %v329 = vld [vmem:[%s177 + $0x3a8] sm:$0xff]
        %v330 = vld [vmem:[%s177 + $0x3b0] sm:$0xff]
        %v331 = vld [vmem:[%s177 + $0x3b8] sm:$0xff]
        %v332 = vld [vmem:[%s177 + $0x3c0] sm:$0xff]
        %v333 = vld [vmem:[%s177 + $0x3c8] sm:$0xff]
        %v334 = vld [vmem:[%s177 + $0x3d0] sm:$0xff]
        %v335 = vld [vmem:[%s177 + $0x3d8] sm:$0xff]
        %v336 = vld [vmem:[%s177 + $0x3e0] sm:$0xff]
        %v337 = vld [vmem:[%s177 + $0x3e8] sm:$0xff]
        %v338 = vld [vmem:[%s177 + $0x3f0] sm:$0xff]
        %v339 = vld [vmem:[%s177 + $0x3f8] sm:$0xff]
        %v468 = vunpack.c.l.b16 %v212
        %v469 = vunpack.c.h.b16 %v212
        %v470 = vunpack.c.l.b16 %v213
        %v471 = vunpack.c.h.b16 %v213
        %v472 = vunpack.c.l.b16 %v214
        %v473 = vunpack.c.h.b16 %v214
        %v474 = vunpack.c.l.b16 %v215
        %v475 = vunpack.c.h.b16 %v215
        %v476 = vunpack.c.l.b16 %v216
        %v477 = vunpack.c.h.b16 %v216
        %v478 = vunpack.c.l.b16 %v217
        %v479 = vunpack.c.h.b16 %v217
        %v480 = vunpack.c.l.b16 %v218
        %v481 = vunpack.c.h.b16 %v218
        %v482 = vunpack.c.l.b16 %v219
        %v483 = vunpack.c.h.b16 %v219
        %v484 = vunpack.c.l.b16 %v220
        %v485 = vunpack.c.h.b16 %v220
        %v486 = vunpack.c.l.b16 %v221
        %v487 = vunpack.c.h.b16 %v221
        %v488 = vunpack.c.l.b16 %v222
        %v489 = vunpack.c.h.b16 %v222
        %v490 = vunpack.c.l.b16 %v223
        %v491 = vunpack.c.h.b16 %v223
        %v492 = vunpack.c.l.b16 %v224
        %v493 = vunpack.c.h.b16 %v224
        %v494 = vunpack.c.l.b16 %v225
        %v495 = vunpack.c.h.b16 %v225
        %v496 = vunpack.c.l.b16 %v226
        %v497 = vunpack.c.h.b16 %v226
        %v498 = vunpack.c.l.b16 %v227
        %v499 = vunpack.c.h.b16 %v227
        %v500 = vunpack.c.l.b16 %v228
        %v501 = vunpack.c.h.b16 %v228
        %v502 = vunpack.c.l.b16 %v229
        %v503 = vunpack.c.h.b16 %v229
        %v504 = vunpack.c.l.b16 %v230
        %v505 = vunpack.c.h.b16 %v230
        %v506 = vunpack.c.l.b16 %v231
        %v507 = vunpack.c.h.b16 %v231
        %v508 = vunpack.c.l.b16 %v232
        %v509 = vunpack.c.h.b16 %v232
        %v510 = vunpack.c.l.b16 %v233
        %v511 = vunpack.c.h.b16 %v233
        %v512 = vunpack.c.l.b16 %v234
        %v513 = vunpack.c.h.b16 %v234
        %v514 = vunpack.c.l.b16 %v235
        %v515 = vunpack.c.h.b16 %v235
        %v516 = vunpack.c.l.b16 %v236
        %v517 = vunpack.c.h.b16 %v236
        %v518 = vunpack.c.l.b16 %v237
        %v519 = vunpack.c.h.b16 %v237
        %v520 = vunpack.c.l.b16 %v238
        %v521 = vunpack.c.h.b16 %v238
        %v522 = vunpack.c.l.b16 %v239
        %v523 = vunpack.c.h.b16 %v239
        %v524 = vunpack.c.l.b16 %v240
        %v525 = vunpack.c.h.b16 %v240
        %v526 = vunpack.c.l.b16 %v241
        %v527 = vunpack.c.h.b16 %v241
        %v528 = vunpack.c.l.b16 %v242
        %v529 = vunpack.c.h.b16 %v242
        %v530 = vunpack.c.l.b16 %v243
        %v531 = vunpack.c.h.b16 %v243
        %v532 = vunpack.c.l.b16 %v244
        %v533 = vunpack.c.h.b16 %v244
        %v534 = vunpack.c.l.b16 %v245
        %v535 = vunpack.c.h.b16 %v245
        %v536 = vunpack.c.l.b16 %v246
        %v537 = vunpack.c.h.b16 %v246
        %v538 = vunpack.c.l.b16 %v247
        %v539 = vunpack.c.h.b16 %v247
        %v540 = vunpack.c.l.b16 %v248
        %v541 = vunpack.c.h.b16 %v248
        %v542 = vunpack.c.l.b16 %v249
        %v543 = vunpack.c.h.b16 %v249
        %v544 = vunpack.c.l.b16 %v250
        %v545 = vunpack.c.h.b16 %v250
        %v546 = vunpack.c.l.b16 %v251
        %v547 = vunpack.c.h.b16 %v251
        %v548 = vunpack.c.l.b16 %v252
        %v549 = vunpack.c.h.b16 %v252
        %v550 = vunpack.c.l.b16 %v253
        %v551 = vunpack.c.h.b16 %v253
        %v552 = vunpack.c.l.b16 %v254
        %v553 = vunpack.c.h.b16 %v254
        %v554 = vunpack.c.l.b16 %v255
        %v555 = vunpack.c.h.b16 %v255
        %v556 = vunpack.c.l.b16 %v256
        %v557 = vunpack.c.h.b16 %v256
        %v558 = vunpack.c.l.b16 %v257
        %v559 = vunpack.c.h.b16 %v257
        %v560 = vunpack.c.l.b16 %v258
        %v561 = vunpack.c.h.b16 %v258
        %v562 = vunpack.c.l.b16 %v259
        %v563 = vunpack.c.h.b16 %v259
        %v564 = vunpack.c.l.b16 %v260
        %v565 = vunpack.c.h.b16 %v260
        %v566 = vunpack.c.l.b16 %v261
        %v567 = vunpack.c.h.b16 %v261
        %v568 = vunpack.c.l.b16 %v262
        %v569 = vunpack.c.h.b16 %v262
        %v570 = vunpack.c.l.b16 %v263
        %v571 = vunpack.c.h.b16 %v263
        %v572 = vunpack.c.l.b16 %v264
        %v573 = vunpack.c.h.b16 %v264
        %v574 = vunpack.c.l.b16 %v265
        %v575 = vunpack.c.h.b16 %v265
        %v576 = vunpack.c.l.b16 %v266
        %v577 = vunpack.c.h.b16 %v266
        %v578 = vunpack.c.l.b16 %v267
        %v579 = vunpack.c.h.b16 %v267
        %v580 = vunpack.c.l.b16 %v268
        %v581 = vunpack.c.h.b16 %v268
        %v582 = vunpack.c.l.b16 %v269
        %v583 = vunpack.c.h.b16 %v269
        %v584 = vunpack.c.l.b16 %v270
        %v585 = vunpack.c.h.b16 %v270
        %v586 = vunpack.c.l.b16 %v271
        %v587 = vunpack.c.h.b16 %v271
        %v588 = vunpack.c.l.b16 %v272
        %v589 = vunpack.c.h.b16 %v272
        %v590 = vunpack.c.l.b16 %v273
        %v591 = vunpack.c.h.b16 %v273
        %v592 = vunpack.c.l.b16 %v274
        %v593 = vunpack.c.h.b16 %v274
        %v594 = vunpack.c.l.b16 %v275
        %v595 = vunpack.c.h.b16 %v275
        %v596 = vunpack.c.l.b16 %v276
        %v597 = vunpack.c.h.b16 %v276
        %v598 = vunpack.c.l.b16 %v277
        %v599 = vunpack.c.h.b16 %v277
        %v600 = vunpack.c.l.b16 %v278
        %v601 = vunpack.c.h.b16 %v278
        %v602 = vunpack.c.l.b16 %v279
        %v603 = vunpack.c.h.b16 %v279
        %v604 = vunpack.c.l.b16 %v280
        %v605 = vunpack.c.h.b16 %v280
        %v606 = vunpack.c.l.b16 %v281
        %v607 = vunpack.c.h.b16 %v281
        %v608 = vunpack.c.l.b16 %v282
        %v609 = vunpack.c.h.b16 %v282
        %v610 = vunpack.c.l.b16 %v283
        %v611 = vunpack.c.h.b16 %v283
        %v612 = vunpack.c.l.b16 %v284
        %v613 = vunpack.c.h.b16 %v284
        %v614 = vunpack.c.l.b16 %v285
        %v615 = vunpack.c.h.b16 %v285
        %v616 = vunpack.c.l.b16 %v286
        %v617 = vunpack.c.h.b16 %v286
        %v618 = vunpack.c.l.b16 %v287
        %v619 = vunpack.c.h.b16 %v287
        %v620 = vunpack.c.l.b16 %v288
        %v621 = vunpack.c.h.b16 %v288
        %v622 = vunpack.c.l.b16 %v289
        %v623 = vunpack.c.h.b16 %v289
        %v624 = vunpack.c.l.b16 %v290
        %v625 = vunpack.c.h.b16 %v290
        %v626 = vunpack.c.l.b16 %v291
        %v627 = vunpack.c.h.b16 %v291
        %v628 = vunpack.c.l.b16 %v292
        %v629 = vunpack.c.h.b16 %v292
        %v630 = vunpack.c.l.b16 %v293
        %v631 = vunpack.c.h.b16 %v293
        %v632 = vunpack.c.l.b16 %v294
        %v633 = vunpack.c.h.b16 %v294
        %v634 = vunpack.c.l.b16 %v295
        %v635 = vunpack.c.h.b16 %v295
        %v636 = vunpack.c.l.b16 %v296
        %v637 = vunpack.c.h.b16 %v296
        %v638 = vunpack.c.l.b16 %v297
        %v639 = vunpack.c.h.b16 %v297
        %v640 = vunpack.c.l.b16 %v298
        %v641 = vunpack.c.h.b16 %v298
        %v642 = vunpack.c.l.b16 %v299
        %v643 = vunpack.c.h.b16 %v299
        %v644 = vunpack.c.l.b16 %v300
        %v645 = vunpack.c.h.b16 %v300
        %v646 = vunpack.c.l.b16 %v301
        %v647 = vunpack.c.h.b16 %v301
        %v648 = vunpack.c.l.b16 %v302
        %v649 = vunpack.c.h.b16 %v302
        %v650 = vunpack.c.l.b16 %v303
        %v651 = vunpack.c.h.b16 %v303
        %v652 = vunpack.c.l.b16 %v304
        %v653 = vunpack.c.h.b16 %v304
        %v654 = vunpack.c.l.b16 %v305
        %v655 = vunpack.c.h.b16 %v305
        %v656 = vunpack.c.l.b16 %v306
        %v657 = vunpack.c.h.b16 %v306
        %v658 = vunpack.c.l.b16 %v307
        %v659 = vunpack.c.h.b16 %v307
        %v660 = vunpack.c.l.b16 %v308
        %v661 = vunpack.c.h.b16 %v308
        %v662 = vunpack.c.l.b16 %v309
        %v663 = vunpack.c.h.b16 %v309
        %v664 = vunpack.c.l.b16 %v310
        %v665 = vunpack.c.h.b16 %v310
        %v666 = vunpack.c.l.b16 %v311
        %v667 = vunpack.c.h.b16 %v311
        %v668 = vunpack.c.l.b16 %v312
        %v669 = vunpack.c.h.b16 %v312
        %v670 = vunpack.c.l.b16 %v313
        %v671 = vunpack.c.h.b16 %v313
        %v672 = vunpack.c.l.b16 %v314
        %v673 = vunpack.c.h.b16 %v314
        %v674 = vunpack.c.l.b16 %v315
        %v675 = vunpack.c.h.b16 %v315
        %v676 = vunpack.c.l.b16 %v316
        %v677 = vunpack.c.h.b16 %v316
        %v678 = vunpack.c.l.b16 %v317
        %v679 = vunpack.c.h.b16 %v317
        %v680 = vunpack.c.l.b16 %v318
        %v681 = vunpack.c.h.b16 %v318
        %v682 = vunpack.c.l.b16 %v319
        %v683 = vunpack.c.h.b16 %v319
        %v684 = vunpack.c.l.b16 %v320
        %v685 = vunpack.c.h.b16 %v320
        %v686 = vunpack.c.l.b16 %v321
        %v687 = vunpack.c.h.b16 %v321
        %v688 = vunpack.c.l.b16 %v322
        %v689 = vunpack.c.h.b16 %v322
        %v690 = vunpack.c.l.b16 %v323
        %v691 = vunpack.c.h.b16 %v323
        %v692 = vunpack.c.l.b16 %v324
        %v693 = vunpack.c.h.b16 %v324
        %v694 = vunpack.c.l.b16 %v325
        %v695 = vunpack.c.h.b16 %v325
        %v696 = vunpack.c.l.b16 %v326
        %v697 = vunpack.c.h.b16 %v326
        %v698 = vunpack.c.l.b16 %v327
        %v699 = vunpack.c.h.b16 %v327
        %v700 = vunpack.c.l.b16 %v328
        %v701 = vunpack.c.h.b16 %v328
        %v702 = vunpack.c.l.b16 %v329
        %v703 = vunpack.c.h.b16 %v329
        %v704 = vunpack.c.l.b16 %v330
        %v705 = vunpack.c.h.b16 %v330
        %v706 = vunpack.c.l.b16 %v331
        %v707 = vunpack.c.h.b16 %v331
        %v708 = vunpack.c.l.b16 %v332
        %v709 = vunpack.c.h.b16 %v332
        %v710 = vunpack.c.l.b16 %v333
        %v711 = vunpack.c.h.b16 %v333
        %v712 = vunpack.c.l.b16 %v334
        %v713 = vunpack.c.h.b16 %v334
        %v714 = vunpack.c.l.b16 %v335
        %v715 = vunpack.c.h.b16 %v335
        %v716 = vunpack.c.l.b16 %v336
        %v717 = vunpack.c.h.b16 %v336
        %v718 = vunpack.c.l.b16 %v337
        %v719 = vunpack.c.h.b16 %v337
        %v720 = vunpack.c.l.b16 %v338
        %v721 = vunpack.c.h.b16 %v338
        %v722 = vunpack.c.l.b16 %v339
        %v723 = vunpack.c.h.b16 %v339
        %v724 = vpack.c.b16 %v484, %v468
        %v725 = vpack.c.b16 %v485, %v469
        %v726 = vpack.c.b16 %v486, %v470
        %v727 = vpack.c.b16 %v487, %v471
        %v728 = vpack.c.b16 %v488, %v472
        %v729 = vpack.c.b16 %v489, %v473
        %v730 = vpack.c.b16 %v490, %v474
        %v731 = vpack.c.b16 %v491, %v475
        %v732 = vpack.c.b16 %v492, %v476
        %v733 = vpack.c.b16 %v493, %v477
        %v734 = vpack.c.b16 %v494, %v478
        %v735 = vpack.c.b16 %v495, %v479
        %v736 = vpack.c.b16 %v496, %v480
        %v737 = vpack.c.b16 %v497, %v481
        %v738 = vpack.c.b16 %v498, %v482
        %v739 = vpack.c.b16 %v499, %v483
        %v740 = vpack.c.b16 %v516, %v500
        %v741 = vpack.c.b16 %v517, %v501
        %v742 = vpack.c.b16 %v518, %v502
        %v743 = vpack.c.b16 %v519, %v503
        %v744 = vpack.c.b16 %v520, %v504
        %v745 = vpack.c.b16 %v521, %v505
        %v746 = vpack.c.b16 %v522, %v506
        %v747 = vpack.c.b16 %v523, %v507
        %v748 = vpack.c.b16 %v524, %v508
        %v749 = vpack.c.b16 %v525, %v509
        %v750 = vpack.c.b16 %v526, %v510
        %v751 = vpack.c.b16 %v527, %v511
        %v752 = vpack.c.b16 %v528, %v512
        %v753 = vpack.c.b16 %v529, %v513
        %v754 = vpack.c.b16 %v530, %v514
        %v755 = vpack.c.b16 %v531, %v515
        %v756 = vpack.c.b16 %v548, %v532
        %v757 = vpack.c.b16 %v549, %v533
        %v758 = vpack.c.b16 %v550, %v534
        %v759 = vpack.c.b16 %v551, %v535
        %v760 = vpack.c.b16 %v552, %v536
        %v761 = vpack.c.b16 %v553, %v537
        %v762 = vpack.c.b16 %v554, %v538
        %v763 = vpack.c.b16 %v555, %v539
        %v764 = vpack.c.b16 %v556, %v540
        %v765 = vpack.c.b16 %v557, %v541
        %v766 = vpack.c.b16 %v558, %v542
        %v767 = vpack.c.b16 %v559, %v543
        %v768 = vpack.c.b16 %v560, %v544
        %v769 = vpack.c.b16 %v561, %v545
        %v770 = vpack.c.b16 %v562, %v546
        %v771 = vpack.c.b16 %v563, %v547
        %v772 = vpack.c.b16 %v580, %v564
        %v773 = vpack.c.b16 %v581, %v565
        %v774 = vpack.c.b16 %v582, %v566
        %v775 = vpack.c.b16 %v583, %v567
        %v776 = vpack.c.b16 %v584, %v568
        %v777 = vpack.c.b16 %v585, %v569
        %v778 = vpack.c.b16 %v586, %v570
        %v779 = vpack.c.b16 %v587, %v571
        %v780 = vpack.c.b16 %v588, %v572
        %v781 = vpack.c.b16 %v589, %v573
        %v782 = vpack.c.b16 %v590, %v574
        %v783 = vpack.c.b16 %v591, %v575
        %v784 = vpack.c.b16 %v592, %v576
        %v785 = vpack.c.b16 %v593, %v577
        %v786 = vpack.c.b16 %v594, %v578
        %v787 = vpack.c.b16 %v595, %v579
        %v788 = vpack.c.b16 %v612, %v596
        %v789 = vpack.c.b16 %v613, %v597
        %v790 = vpack.c.b16 %v614, %v598
        %v791 = vpack.c.b16 %v615, %v599
        %v792 = vpack.c.b16 %v616, %v600
        %v793 = vpack.c.b16 %v617, %v601
        %v794 = vpack.c.b16 %v618, %v602
        %v795 = vpack.c.b16 %v619, %v603
        %v796 = vpack.c.b16 %v620, %v604
        %v797 = vpack.c.b16 %v621, %v605
        %v798 = vpack.c.b16 %v622, %v606
        %v799 = vpack.c.b16 %v623, %v607
        %v800 = vpack.c.b16 %v624, %v608
        %v801 = vpack.c.b16 %v625, %v609
        %v802 = vpack.c.b16 %v626, %v610
        %v803 = vpack.c.b16 %v627, %v611
        %v804 = vpack.c.b16 %v644, %v628
        %v805 = vpack.c.b16 %v645, %v629
        %v806 = vpack.c.b16 %v646, %v630
        %v807 = vpack.c.b16 %v647, %v631
        %v808 = vpack.c.b16 %v648, %v632
        %v809 = vpack.c.b16 %v649, %v633
        %v810 = vpack.c.b16 %v650, %v634
        %v811 = vpack.c.b16 %v651, %v635
        %v812 = vpack.c.b16 %v652, %v636
        %v813 = vpack.c.b16 %v653, %v637
        %v814 = vpack.c.b16 %v654, %v638
        %v815 = vpack.c.b16 %v655, %v639
        %v816 = vpack.c.b16 %v656, %v640
        %v817 = vpack.c.b16 %v657, %v641
        %v818 = vpack.c.b16 %v658, %v642
        %v819 = vpack.c.b16 %v659, %v643
        %v820 = vpack.c.b16 %v676, %v660
        %v821 = vpack.c.b16 %v677, %v661
        %v822 = vpack.c.b16 %v678, %v662
        %v823 = vpack.c.b16 %v679, %v663
        %v824 = vpack.c.b16 %v680, %v664
        %v825 = vpack.c.b16 %v681, %v665
        %v826 = vpack.c.b16 %v682, %v666
        %v827 = vpack.c.b16 %v683, %v667
        %v828 = vpack.c.b16 %v684, %v668
        %v829 = vpack.c.b16 %v685, %v669
        %v830 = vpack.c.b16 %v686, %v670
        %v831 = vpack.c.b16 %v687, %v671
        %v832 = vpack.c.b16 %v688, %v672
        %v833 = vpack.c.b16 %v689, %v673
        %v834 = vpack.c.b16 %v690, %v674
        %v835 = vpack.c.b16 %v691, %v675
        %v836 = vpack.c.b16 %v708, %v692
        %v837 = vpack.c.b16 %v709, %v693
        %v838 = vpack.c.b16 %v710, %v694
        %v839 = vpack.c.b16 %v711, %v695
        %v840 = vpack.c.b16 %v712, %v696
        %v841 = vpack.c.b16 %v713, %v697
        %v842 = vpack.c.b16 %v714, %v698
        %v843 = vpack.c.b16 %v715, %v699
        %v844 = vpack.c.b16 %v716, %v700
        %v845 = vpack.c.b16 %v717, %v701
        %v846 = vpack.c.b16 %v718, %v702
        %v847 = vpack.c.b16 %v719, %v703
        %v848 = vpack.c.b16 %v720, %v704
        %v849 = vpack.c.b16 %v721, %v705
        %v850 = vpack.c.b16 %v722, %v706
        %v851 = vpack.c.b16 %v723, %v707
        %980 = vmatpush.bf16.msra.mxu0 %v836
        %981 = vmatpush.bf16.msra.mxu0 %v820
        %982 = vmatpush.bf16.msra.mxu0 %v804
        %983 = vmatpush.bf16.msra.mxu0 %v788
        %984 = vmatpush.bf16.msra.mxu0 %v772
        %985 = vmatpush.bf16.msra.mxu0 %v756
        %986 = vmatpush.bf16.msra.mxu0 %v740
        %987 = vmatpush.bf16.msra.mxu0 %v724
        %988 = vmatmul.bf16.gmra.mxu0 %v211
        %v989 = vpop.f32.mrf.mxu0
        %v990 = vadd.f32 0.0, %v989
        %v991 = vpop.f32.mrf.mxu0
        %992 = vdwg.mxu0
        %993 = vmatpush.bf16.msra.mxu0 %v837
        %994 = vmatpush.bf16.msra.mxu0 %v821
        %995 = vmatpush.bf16.msra.mxu0 %v805
        %996 = vmatpush.bf16.msra.mxu0 %v789
        %997 = vmatpush.bf16.msra.mxu0 %v773
        %998 = vmatpush.bf16.msra.mxu0 %v757
        %999 = vmatpush.bf16.msra.mxu0 %v741
        %1000 = vmatpush.bf16.msra.mxu0 %v725
        %1001 = vmatmul.bf16.gmra.mxu0 %v211
        %v1002 = vpop.f32.mrf.mxu0
        %v1003 = vadd.f32 0.0, %v1002
        %v1004 = vpop.f32.mrf.mxu0
        %1005 = vdwg.mxu0
        %1006 = vmatpush.bf16.msra.mxu0 %v838
        %1007 = vmatpush.bf16.msra.mxu0 %v822
        %1008 = vmatpush.bf16.msra.mxu0 %v806
        %1009 = vmatpush.bf16.msra.mxu0 %v790
        %1010 = vmatpush.bf16.msra.mxu0 %v774
        %1011 = vmatpush.bf16.msra.mxu0 %v758
        %1012 = vmatpush.bf16.msra.mxu0 %v742
        %1013 = vmatpush.bf16.msra.mxu0 %v726
        %1014 = vmatmul.bf16.gmra.mxu0 %v211
        %v1015 = vpop.f32.mrf.mxu0
        %v1016 = vadd.f32 0.0, %v1015
        %v1017 = vpop.f32.mrf.mxu0
        %1018 = vdwg.mxu0
        %1019 = vmatpush.bf16.msra.mxu0 %v839
        %1020 = vmatpush.bf16.msra.mxu0 %v823
        %1021 = vmatpush.bf16.msra.mxu0 %v807
        %1022 = vmatpush.bf16.msra.mxu0 %v791
        %1023 = vmatpush.bf16.msra.mxu0 %v775
        %1024 = vmatpush.bf16.msra.mxu0 %v759
        %1025 = vmatpush.bf16.msra.mxu0 %v743
        %1026 = vmatpush.bf16.msra.mxu0 %v727
        %1027 = vmatmul.bf16.gmra.mxu0 %v211
        %v1028 = vpop.f32.mrf.mxu0
        %v1029 = vadd.f32 0.0, %v1028
        %v1030 = vpop.f32.mrf.mxu0
        %1031 = vdwg.mxu0
        %1032 = vmatpush.bf16.msra.mxu0 %v840
        %1033 = vmatpush.bf16.msra.mxu0 %v824
        %1034 = vmatpush.bf16.msra.mxu0 %v808
        %1035 = vmatpush.bf16.msra.mxu0 %v792
        %1036 = vmatpush.bf16.msra.mxu0 %v776
        %1037 = vmatpush.bf16.msra.mxu0 %v760
        %1038 = vmatpush.bf16.msra.mxu0 %v744
        %1039 = vmatpush.bf16.msra.mxu0 %v728
        %1040 = vmatmul.bf16.gmra.mxu0 %v211
        %v1041 = vpop.f32.mrf.mxu0
        %v1042 = vadd.f32 0.0, %v1041
        %v1043 = vpop.f32.mrf.mxu0
        %1044 = vdwg.mxu0
        %1045 = vmatpush.bf16.msra.mxu0 %v841
        %1046 = vmatpush.bf16.msra.mxu0 %v825
        %1047 = vmatpush.bf16.msra.mxu0 %v809
        %1048 = vmatpush.bf16.msra.mxu0 %v793
        %1049 = vmatpush.bf16.msra.mxu0 %v777
        %1050 = vmatpush.bf16.msra.mxu0 %v761
        %1051 = vmatpush.bf16.msra.mxu0 %v745
        %1052 = vmatpush.bf16.msra.mxu0 %v729
        %1053 = vmatmul.bf16.gmra.mxu0 %v211
        %v1054 = vpop.f32.mrf.mxu0
        %v1055 = vadd.f32 0.0, %v1054
        %v1056 = vpop.f32.mrf.mxu0
        %1057 = vdwg.mxu0
        %1058 = vmatpush.bf16.msra.mxu0 %v842
        %1059 = vmatpush.bf16.msra.mxu0 %v826
        %1060 = vmatpush.bf16.msra.mxu0 %v810
        %1061 = vmatpush.bf16.msra.mxu0 %v794
        %1062 = vmatpush.bf16.msra.mxu0 %v778
        %1063 = vmatpush.bf16.msra.mxu0 %v762
        %1064 = vmatpush.bf16.msra.mxu0 %v746
        %1065 = vmatpush.bf16.msra.mxu0 %v730
        %1066 = vmatmul.bf16.gmra.mxu0 %v211
        %v1067 = vpop.f32.mrf.mxu0
        %v1068 = vadd.f32 0.0, %v1067
        %v1069 = vpop.f32.mrf.mxu0
        %1070 = vdwg.mxu0
        %1071 = vmatpush.bf16.msra.mxu0 %v843
        %1072 = vmatpush.bf16.msra.mxu0 %v827
        %1073 = vmatpush.bf16.msra.mxu0 %v811
        %1074 = vmatpush.bf16.msra.mxu0 %v795
        %1075 = vmatpush.bf16.msra.mxu0 %v779
        %1076 = vmatpush.bf16.msra.mxu0 %v763
        %1077 = vmatpush.bf16.msra.mxu0 %v747
        %1078 = vmatpush.bf16.msra.mxu0 %v731
        %1079 = vmatmul.bf16.gmra.mxu0 %v211
        %v1080 = vpop.f32.mrf.mxu0
        %v1081 = vadd.f32 0.0, %v1080
        %v1082 = vpop.f32.mrf.mxu0
        %1083 = vdwg.mxu0
        %1084 = vmatpush.bf16.msra.mxu0 %v844
        %1085 = vmatpush.bf16.msra.mxu0 %v828
        %1086 = vmatpush.bf16.msra.mxu0 %v812
        %1087 = vmatpush.bf16.msra.mxu0 %v796
        %1088 = vmatpush.bf16.msra.mxu0 %v780
        %1089 = vmatpush.bf16.msra.mxu0 %v764
        %1090 = vmatpush.bf16.msra.mxu0 %v748
        %1091 = vmatpush.bf16.msra.mxu0 %v732
        %1092 = vmatmul.bf16.gmra.mxu0 %v211
        %v1093 = vpop.f32.mrf.mxu0
        %v1094 = vadd.f32 0.0, %v1093
        %v1095 = vpop.f32.mrf.mxu0
        %1096 = vdwg.mxu0
        %1097 = vmatpush.bf16.msra.mxu0 %v845
        %1098 = vmatpush.bf16.msra.mxu0 %v829
        %1099 = vmatpush.bf16.msra.mxu0 %v813
        %1100 = vmatpush.bf16.msra.mxu0 %v797
        %1101 = vmatpush.bf16.msra.mxu0 %v781
        %1102 = vmatpush.bf16.msra.mxu0 %v765
        %1103 = vmatpush.bf16.msra.mxu0 %v749
        %1104 = vmatpush.bf16.msra.mxu0 %v733
        %1105 = vmatmul.bf16.gmra.mxu0 %v211
        %v1106 = vpop.f32.mrf.mxu0
        %v1107 = vadd.f32 0.0, %v1106
        %v1108 = vpop.f32.mrf.mxu0
        %1109 = vdwg.mxu0
        %1110 = vmatpush.bf16.msra.mxu0 %v846
        %1111 = vmatpush.bf16.msra.mxu0 %v830
        %1112 = vmatpush.bf16.msra.mxu0 %v814
        %1113 = vmatpush.bf16.msra.mxu0 %v798
        %1114 = vmatpush.bf16.msra.mxu0 %v782
        %1115 = vmatpush.bf16.msra.mxu0 %v766
        %1116 = vmatpush.bf16.msra.mxu0 %v750
        %1117 = vmatpush.bf16.msra.mxu0 %v734
        %1118 = vmatmul.bf16.gmra.mxu0 %v211
        %v1119 = vpop.f32.mrf.mxu0
        %v1120 = vadd.f32 0.0, %v1119
        %v1121 = vpop.f32.mrf.mxu0
        %1122 = vdwg.mxu0
        %1123 = vmatpush.bf16.msra.mxu0 %v847
        %1124 = vmatpush.bf16.msra.mxu0 %v831
        %1125 = vmatpush.bf16.msra.mxu0 %v815
        %1126 = vmatpush.bf16.msra.mxu0 %v799
        %1127 = vmatpush.bf16.msra.mxu0 %v783
        %1128 = vmatpush.bf16.msra.mxu0 %v767
        %1129 = vmatpush.bf16.msra.mxu0 %v751
        %1130 = vmatpush.bf16.msra.mxu0 %v735
        %1131 = vmatmul.bf16.gmra.mxu0 %v211
        %v1132 = vpop.f32.mrf.mxu0
        %v1133 = vadd.f32 0.0, %v1132
        %v1134 = vpop.f32.mrf.mxu0
        %1135 = vdwg.mxu0
        %1136 = vmatpush.bf16.msra.mxu0 %v848
        %1137 = vmatpush.bf16.msra.mxu0 %v832
        %1138 = vmatpush.bf16.msra.mxu0 %v816
        %1139 = vmatpush.bf16.msra.mxu0 %v800
        %1140 = vmatpush.bf16.msra.mxu0 %v784
        %1141 = vmatpush.bf16.msra.mxu0 %v768
        %1142 = vmatpush.bf16.msra.mxu0 %v752
        %1143 = vmatpush.bf16.msra.mxu0 %v736
        %1144 = vmatmul.bf16.gmra.mxu0 %v211
        %v1145 = vpop.f32.mrf.mxu0
        %v1146 = vadd.f32 0.0, %v1145
        %v1147 = vpop.f32.mrf.mxu0
        %1148 = vdwg.mxu0
        %1149 = vmatpush.bf16.msra.mxu0 %v849
        %1150 = vmatpush.bf16.msra.mxu0 %v833
        %1151 = vmatpush.bf16.msra.mxu0 %v817
        %1152 = vmatpush.bf16.msra.mxu0 %v801
        %1153 = vmatpush.bf16.msra.mxu0 %v785
        %1154 = vmatpush.bf16.msra.mxu0 %v769
        %1155 = vmatpush.bf16.msra.mxu0 %v753
        %1156 = vmatpush.bf16.msra.mxu0 %v737
        %1157 = vmatmul.bf16.gmra.mxu0 %v211
        %v1158 = vpop.f32.mrf.mxu0
        %v1159 = vadd.f32 0.0, %v1158
        %v1160 = vpop.f32.mrf.mxu0
        %1161 = vdwg.mxu0
        %1162 = vmatpush.bf16.msra.mxu0 %v850
        %1163 = vmatpush.bf16.msra.mxu0 %v834
        %1164 = vmatpush.bf16.msra.mxu0 %v818
        %1165 = vmatpush.bf16.msra.mxu0 %v802
        %1166 = vmatpush.bf16.msra.mxu0 %v786
        %1167 = vmatpush.bf16.msra.mxu0 %v770
        %1168 = vmatpush.bf16.msra.mxu0 %v754
        %1169 = vmatpush.bf16.msra.mxu0 %v738
        %1170 = vmatmul.bf16.gmra.mxu0 %v211
        %v1171 = vpop.f32.mrf.mxu0
        %v1172 = vadd.f32 0.0, %v1171
        %v1173 = vpop.f32.mrf.mxu0
        %1174 = vdwg.mxu0
        %1175 = vmatpush.bf16.msra.mxu0 %v851
        %1176 = vmatpush.bf16.msra.mxu0 %v835
        %1177 = vmatpush.bf16.msra.mxu0 %v819
        %1178 = vmatpush.bf16.msra.mxu0 %v803
        %1179 = vmatpush.bf16.msra.mxu0 %v787
        %1180 = vmatpush.bf16.msra.mxu0 %v771
        %1181 = vmatpush.bf16.msra.mxu0 %v755
        %1182 = vmatpush.bf16.msra.mxu0 %v739
        %1183 = vmatmul.bf16.gmra.mxu0 %v211
        %v1184 = vpop.f32.mrf.mxu0
        %v1185 = vadd.f32 0.0, %v1184
        %v1186 = vpop.f32.mrf.mxu0
        %1187 = vdwg.mxu0
        %v1188 = vld [vmem:[%s210] sm:$0xff]
        %v1189 = vld [vmem:[%s210 + $0x8] sm:$0xff]
        %v1190 = vld [vmem:[%s210 + $0x10] sm:$0xff]
        %v1191 = vld [vmem:[%s210 + $0x18] sm:$0xff]
        %1193 = vset.pattern.permute.xlu0 0
        %1194 = vperm.xlu0 %1193, %v1188
        %v1195 = vpop.permute.xlu0 %1194
        %v1197 = vmul.f32 %v990, %v1195
        %v1198 = vmul.f32 %v1003, %v1195
        %v1199 = vmul.f32 %v1016, %v1195
        %v1200 = vmul.f32 %v1029, %v1195
        %1201 = vset.pattern.permute.xlu0 1
        %1202 = vperm.xlu0 %1201, %v1188
        %v1203 = vpop.permute.xlu0 %1202
        %v1205 = vadd.f32 %v1197, %v1203
        %v1206 = vadd.f32 %v1198, %v1203
        %v1207 = vadd.f32 %v1199, %v1203
        %v1208 = vadd.f32 %v1200, %v1203
        %1209 = vst [vmem:[%s205] sm:$0xff] %v1205
        %1210 = vst [vmem:[%s205 + $0x8] sm:$0xff] %v1206
        %1211 = vst [vmem:[%s205 + $0x10] sm:$0xff] %v1207
        %1212 = vst [vmem:[%s205 + $0x18] sm:$0xff] %v1208
        %1214 = vset.pattern.permute.xlu0 0
        %1215 = vperm.xlu0 %1214, %v1189
        %v1216 = vpop.permute.xlu0 %1215
        %v1218 = vmul.f32 %v1042, %v1216
        %v1219 = vmul.f32 %v1055, %v1216
        %v1220 = vmul.f32 %v1068, %v1216
        %v1221 = vmul.f32 %v1081, %v1216
        %1222 = vset.pattern.permute.xlu0 1
        %1223 = vperm.xlu0 %1222, %v1189
        %v1224 = vpop.permute.xlu0 %1223
        %v1226 = vadd.f32 %v1218, %v1224
        %v1227 = vadd.f32 %v1219, %v1224
        %v1228 = vadd.f32 %v1220, %v1224
        %v1229 = vadd.f32 %v1221, %v1224
        %1230 = vst [vmem:[%s205 + $0x20] sm:$0xff] %v1226
        %1231 = vst [vmem:[%s205 + $0x28] sm:$0xff] %v1227
        %1232 = vst [vmem:[%s205 + $0x30] sm:$0xff] %v1228
        %1233 = vst [vmem:[%s205 + $0x38] sm:$0xff] %v1229
        %1235 = vset.pattern.permute.xlu0 0
        %1236 = vperm.xlu0 %1235, %v1190
        %v1237 = vpop.permute.xlu0 %1236
        %v1239 = vmul.f32 %v1094, %v1237
        %v1240 = vmul.f32 %v1107, %v1237
        %v1241 = vmul.f32 %v1120, %v1237
        %v1242 = vmul.f32 %v1133, %v1237
        %1243 = vset.pattern.permute.xlu0 1
        %1244 = vperm.xlu0 %1243, %v1190
        %v1245 = vpop.permute.xlu0 %1244
        %v1247 = vadd.f32 %v1239, %v1245
        %v1248 = vadd.f32 %v1240, %v1245
        %v1249 = vadd.f32 %v1241, %v1245
        %v1250 = vadd.f32 %v1242, %v1245
        %1251 = vst [vmem:[%s205 + $0x40] sm:$0xff] %v1247
        %1252 = vst [vmem:[%s205 + $0x48] sm:$0xff] %v1248
        %1253 = vst [vmem:[%s205 + $0x50] sm:$0xff] %v1249
        %1254 = vst [vmem:[%s205 + $0x58] sm:$0xff] %v1250
        %1256 = vset.pattern.permute.xlu0 0
        %1257 = vperm.xlu0 %1256, %v1191
        %v1258 = vpop.permute.xlu0 %1257
        %v1260 = vmul.f32 %v1146, %v1258
        %v1261 = vmul.f32 %v1159, %v1258
        %v1262 = vmul.f32 %v1172, %v1258
        %v1263 = vmul.f32 %v1185, %v1258
        %1264 = vset.pattern.permute.xlu0 1
        %1265 = vperm.xlu0 %1264, %v1191
        %v1266 = vpop.permute.xlu0 %1265
        %v1268 = vadd.f32 %v1260, %v1266
        %v1269 = vadd.f32 %v1261, %v1266
        %v1270 = vadd.f32 %v1262, %v1266
        %v1271 = vadd.f32 %v1263, %v1266
        %1272 = vst [vmem:[%s205 + $0x60] sm:$0xff] %v1268
        %1273 = vst [vmem:[%s205 + $0x68] sm:$0xff] %v1269
        %1274 = vst [vmem:[%s205 + $0x70] sm:$0xff] %v1270
        %1275 = vst [vmem:[%s205 + $0x78] sm:$0xff] %v1271
        %s1276 = sand.u32 %s101, 1
        %s1277 = scalar_lea.sflag [#allocation4], %s1276
        %s1278 = sand.u32 %s101, 1
        %s1279 = smul.addr %s1278, 128
        %s1280 = scalar_lea.vmem [#allocation5], %s1279
        // Predicated region
        $region37: #{tpu_custom_call.1} parent=31 // pred_check
          %p1281 = pneg %p111
        $region38: #{tpu_custom_call.1} parent=31 // pred_check_branch
          %1283 = sbr.rel (%p1281) target = $region40
        $region39: #{tpu_custom_call.1} parent=31 // pred_region
          %1285 = vsyncadd %s1277, 0
          %s1286 = smul.addr %s20, 16
          %s1287 = smul.addr %s1286, 8
          %s1288 = scalar_lea.hbm %s3, %s1287
          %s1290 = sshll.u32 %s1280, 4
          %s1291 = int_to_ptr.vmem [resolvable:$true] %s1290
          %s1292 = sshll.u32 %s1288, 4
          %s1293 = int_to_ptr.hbm [resolvable:$true] %s1292
          %1295 = dma.vmem_to_hbm [thread:$0]  %s1291, 2048, %s1293, %s1277
        $region40: #{tpu_custom_call.1} parent=31 // pred_fallthru
          _
      $region32: #{tpu_custom_call.1} parent=5 // pred_fallthru
        _
      %p1296 = scmp.le.s32.totalorder 2, %s15
      // Predicated region
      $region41: #{tpu_custom_call.1} parent=5 // pred_check
        %p1297 = pneg %p1296
      $region42: #{tpu_custom_call.1} parent=5 // pred_check_branch
        %1299 = sbr.rel (%p1297) target = $region44
      $region43: #{tpu_custom_call.1} parent=5 // pred_region
        %s1300 = ssub.s32 %s15, 2
        // Predicated region
        $region45: #{tpu_custom_call.1} parent=43 // pred_check
          %p1301 = pneg %p117
        $region46: #{tpu_custom_call.1} parent=43 // pred_check_branch
          %1303 = sbr.rel (%p1301) target = $region48
        $region47: #{tpu_custom_call.1} parent=43 // pred_region
          %s1304 = sand.u32 %s102, 1
          %s1305 = scalar_lea.sflag [#allocation4], %s1304
          %s1306 = sand.u32 %s102, 1
          %s1307 = smul.addr %s1306, 128
          %s1308 = scalar_lea.vmem [#allocation5], %s1307
          %1310 = dma.done %s1305, 2048
        $region48: #{tpu_custom_call.1} parent=43 // pred_fallthru
          _
      $region44: #{tpu_custom_call.1} parent=5 // pred_fallthru
        _
    $region6: #{tpu_custom_call.1} parent=1 // loop_footer
      %s19 = sadd.s32 1, %s15
    $region7: #{tpu_custom_call.1} parent=1 // loop_footer_branch
      %14 = sbr.rel target = $region3
    $region8: #{tpu_custom_call.1} parent=1 // loop_exit
      _
    %1311 = vsyncpa [#allocation3], 1
    %s1312 = scalar_lea.sflag [#allocation3], 1
    %1313 = vsyncpa %s1312, 1
    %1314 = vsyncpa [#allocation4], 1
    %s1315 = scalar_lea.sflag [#allocation4], 1
    %1316 = vsyncpa %s1315, 1

</llo_original>
